<compile_context>
chip_gen: v7x
topology: tpu7x:2x2x1
jax: 0.10.0
libtpu: 0.0.40
codegen_flags: <defaults>
</compile_context>

<pallas_src>
import jax
import jax.numpy as jnp
from jax.experimental import pallas as pl
from jax.experimental.pallas import tpu as pltpu

HIDDEN = 30
NUM_LAYERS = 6  # number of (Tanh, shared-Linear) repetitions


def _mlp_kernel(x_ref, w_in_ref, b_in_ref, w_h_ref, b_h_ref, w_o_ref, b_o_ref,
                o_ref):
    # Transposed layout: x_ref is (2, tm); hidden state is (HIDDEN, tm);
    # output tile is (1, tm).  Weights arrive as [out, in] (already transposed
    # by the wrapper) so every layer is  h_new = W @ h + b.
    tm = x_ref.shape[1]
    x = x_ref[...]                                   # (2, tm)

    # Input layer (K=2): do it on the VPU instead of the MXU.
    #   h = W_in[:,0:1] * x[0] + W_in[:,1:2] * x[1] + b_in     -> (HIDDEN, tm)
    h = (w_in_ref[:, 0:1] * x[0:1, :]
         + w_in_ref[:, 1:2] * x[1:2, :]
         + b_in_ref[...])

    # 6 x (Tanh -> shared hidden Linear):  (30,30) @ (30,tm) + b
    w_h = w_h_ref[...]                               # (HIDDEN, HIDDEN)
    b_h = jnp.broadcast_to(b_h_ref[...], (HIDDEN, tm))   # hoisted broadcast
    for _ in range(NUM_LAYERS):
        h = jnp.dot(w_h, jnp.tanh(h),
                    preferred_element_type=jnp.float32) + b_h

    # Tanh -> output layer: (1,30) @ (30,tm) + b  -> lane-dense (1, tm) store.
    o_ref[...] = jnp.dot(w_o_ref[...], jnp.tanh(h),
                         preferred_element_type=jnp.float32) + b_o_ref[...]


def _pick_tm(n, tm_cap=1024):
    """Lane-multiple tile size: as large as reasonable, but keep >=2 grid
    steps for megacore (v7x) when n allows it."""
    half = (n + 1) // 2
    tm = ((half + 127) // 128) * 128      # round up to a multiple of 128
    return int(max(128, min(tm, tm_cap)))


def nn_u_forward(x, params, *, tm=None):
    """x: [N, 2] float32 (any N). Returns [N, 1] float32."""
    w_in, b_in, w_h, b_h, w_o, b_o = params
    N, C = x.shape
    assert C == 2

    if tm is None:
        tm = _pick_tm(N)
    n_pad = pl.cdiv(N, tm) * tm

    # Transpose to feature-major (points on the lane axis) and zero-pad N.
    x_t = jnp.zeros((2, n_pad), jnp.float32).at[:, :N].set(x.T)

    # Transpose weights once (now [out, in], like torch) and make biases columns.
    w_in_t = w_in.T                    # (HIDDEN, 2)
    b_in_c = b_in.reshape(HIDDEN, 1)   # (HIDDEN, 1)
    w_h_t = w_h.T                      # (HIDDEN, HIDDEN)
    b_h_c = b_h.reshape(HIDDEN, 1)     # (HIDDEN, 1)
    w_o_t = w_o.T                      # (1, HIDDEN)
    b_o_c = b_o.reshape(1, 1)          # (1, 1)

    full = lambda shape: pl.BlockSpec(shape, lambda i: (0,) * len(shape))

    out_t = pl.pallas_call(
        _mlp_kernel,
        out_shape=jax.ShapeDtypeStruct((1, n_pad), jnp.float32),
        grid_spec=pltpu.PrefetchScalarGridSpec(
            num_scalar_prefetch=0,
            grid=(n_pad // tm,),
            in_specs=[
                pl.BlockSpec((2, tm), lambda i: (0, i)),   # x tile (2, tm)
                full((HIDDEN, 2)),                         # W_in^T
                full((HIDDEN, 1)),                         # b_in (column)
                full((HIDDEN, HIDDEN)),                    # W_hidden^T (shared)
                full((HIDDEN, 1)),                         # b_hidden (column)
                full((1, HIDDEN)),                         # W_out^T
                full((1, 1)),                              # b_out
            ],
            out_specs=pl.BlockSpec((1, tm), lambda i: (0, i)),
        ),
        compiler_params=pltpu.CompilerParams(
            dimension_semantics=("parallel",)),
    )(x_t, w_in_t, b_in_c, w_h_t, b_h_c, w_o_t, b_o_c)

    # (1, n_pad) -> drop padding -> (N, 1)
    return out_t[:, :N].T


def init_params(key):
    """Deterministic init mimicking torch.nn.Linear default (U(-1/sqrt(fan_in), ...)).
    Weights stored as [in_features, out_features]."""
    ks = jax.random.split(key, 6)

    def uni(k, shape, fan_in):
        bound = 1.0 / jnp.sqrt(jnp.float32(fan_in))
        return jax.random.uniform(k, shape, jnp.float32, -bound, bound)

    w_in = uni(ks[0], (2, HIDDEN), 2)
    b_in = uni(ks[1], (1, HIDDEN), 2)
    w_h = uni(ks[2], (HIDDEN, HIDDEN), HIDDEN)
    b_h = uni(ks[3], (1, HIDDEN), HIDDEN)
    w_o = uni(ks[4], (HIDDEN, 1), HIDDEN)
    b_o = uni(ks[5], (1, 1), HIDDEN)
    return (w_in, b_in, w_h, b_h, w_o, b_o)


def nn_u_reference(x, params):
    """Pure-JAX reference of the PyTorch forward (for sanity checking)."""
    w_in, b_in, w_h, b_h, w_o, b_o = params
    h = x @ w_in + b_in
    for _ in range(NUM_LAYERS):
        h = jnp.tanh(h) @ w_h + b_h
    return jnp.tanh(h) @ w_o + b_o


if __name__ == "__main__":
    key = jax.random.PRNGKey(0)
    k_param, k_x = jax.random.split(key)

    params = init_params(k_param)

    # [L, 2] points (e.g. (x, y) collocation points), L = 256.
    x = jax.random.uniform(k_x, (256, 2), jnp.float32, -0.5, 1.5)

    out = jax.block_until_ready(nn_u_forward(x, params))
    ref = nn_u_reference(x, params)

    assert out.shape == (256, 1)
    assert jnp.allclose(out, ref, atol=2e-5, rtol=1e-4)
    print("KERNEL_OK")
</pallas_src>

<mosaic_0001>
module attributes {stable_mosaic.version = 11 : i64} {
  func.func @_mlp_kernel(%arg0: i32, %arg1: memref<2x128xf32, #tpu.memory_space<vmem>>, %arg2: memref<30x2xf32, #tpu.memory_space<vmem>>, %arg3: memref<30x1xf32, #tpu.memory_space<vmem>>, %arg4: memref<30x30xf32, #tpu.memory_space<vmem>>, %arg5: memref<30x1xf32, #tpu.memory_space<vmem>>, %arg6: memref<1x30xf32, #tpu.memory_space<vmem>>, %arg7: memref<1x1xf32, #tpu.memory_space<vmem>>, %arg8: memref<1x128xf32, #tpu.memory_space<vmem>>) attributes {dimension_semantics = [#tpu.dimension_semantics<parallel>], iteration_bounds = array<i64: 2>, scalar_prefetch = 0 : i64, scratch_operands = 0 : i64, tpu.core_type = #tpu.core_type<tc>, window_params = [{transform_indices = @transform_0, window_bounds = array<i64: 2, 128>}, {pipeline_mode = #tpu.pipeline_mode<synchronous>, transform_indices = @transform_1, window_bounds = array<i64: 30, 2>}, {pipeline_mode = #tpu.pipeline_mode<synchronous>, transform_indices = @transform_2, window_bounds = array<i64: 30, 1>}, {pipeline_mode = #tpu.pipeline_mode<synchronous>, transform_indices = @transform_3, window_bounds = array<i64: 30, 30>}, {pipeline_mode = #tpu.pipeline_mode<synchronous>, transform_indices = @transform_4, window_bounds = array<i64: 30, 1>}, {pipeline_mode = #tpu.pipeline_mode<synchronous>, transform_indices = @transform_5, window_bounds = array<i64: 1, 30>}, {pipeline_mode = #tpu.pipeline_mode<synchronous>, transform_indices = @transform_6, window_bounds = array<i64: 1, 1>}, {transform_indices = @transform_7, window_bounds = array<i64: 1, 128>}]} {
    %c0 = arith.constant 0 : index
    %c0_0 = arith.constant 0 : index
    %0 = vector.load %arg1[%c0, %c0_0] : memref<2x128xf32, #tpu.memory_space<vmem>>, vector<2x128xf32>
    %c0_1 = arith.constant 0 : index
    %c0_2 = arith.constant 0 : index
    %1 = vector.load %arg2[%c0_1, %c0_2] : memref<30x2xf32, #tpu.memory_space<vmem>>, vector<30x1xf32>
    %2 = vector.extract_strided_slice %0 {offsets = [0, 0], sizes = [1, 128], strides = [1, 1]} : vector<2x128xf32> to vector<1x128xf32>
    %3 = vector.broadcast %1 : vector<30x1xf32> to vector<30x128xf32>
    %4 = vector.broadcast %2 : vector<1x128xf32> to vector<30x128xf32>
    %5 = arith.mulf %3, %4 : vector<30x128xf32>
    %c0_3 = arith.constant 0 : index
    %c1 = arith.constant 1 : index
    %6 = vector.load %arg2[%c0_3, %c1] : memref<30x2xf32, #tpu.memory_space<vmem>>, vector<30x1xf32>
    %7 = vector.extract_strided_slice %0 {offsets = [1, 0], sizes = [1, 128], strides = [1, 1]} : vector<2x128xf32> to vector<1x128xf32>
    %8 = vector.broadcast %6 : vector<30x1xf32> to vector<30x128xf32>
    %9 = vector.broadcast %7 : vector<1x128xf32> to vector<30x128xf32>
    %10 = arith.mulf %8, %9 : vector<30x128xf32>
    %11 = arith.addf %5, %10 : vector<30x128xf32>
    %c0_4 = arith.constant 0 : index
    %c0_5 = arith.constant 0 : index
    %12 = vector.load %arg3[%c0_4, %c0_5] : memref<30x1xf32, #tpu.memory_space<vmem>>, vector<30x1xf32>
    %13 = vector.broadcast %12 : vector<30x1xf32> to vector<30x128xf32>
    %14 = arith.addf %11, %13 : vector<30x128xf32>
    %c0_6 = arith.constant 0 : index
    %c0_7 = arith.constant 0 : index
    %15 = vector.load %arg4[%c0_6, %c0_7] : memref<30x30xf32, #tpu.memory_space<vmem>>, vector<30x30xf32>
    %c0_8 = arith.constant 0 : index
    %c0_9 = arith.constant 0 : index
    %16 = vector.load %arg5[%c0_8, %c0_9] : memref<30x1xf32, #tpu.memory_space<vmem>>, vector<30x1xf32>
    %17 = vector.shape_cast %16 : vector<30x1xf32> to vector<30x1xf32>
    %18 = vector.broadcast %17 : vector<30x1xf32> to vector<30x128xf32>
    %19 = math.tanh %14 : vector<30x128xf32>
    %cst = arith.constant dense<0.000000e+00> : vector<30x128xf32>
    %20 = tpu.matmul %15, %19, %cst {dimension_numbers = #tpu.dot_dimension_numbers<[1], [0], [0], [1], [0, 0, 1, 1], [], []>} : vector<30x30xf32>, vector<30x128xf32>, vector<30x128xf32> -> vector<30x128xf32>
    %21 = arith.addf %20, %18 : vector<30x128xf32>
    %22 = math.tanh %21 : vector<30x128xf32>
    %cst_10 = arith.constant dense<0.000000e+00> : vector<30x128xf32>
    %23 = tpu.matmul %15, %22, %cst_10 {dimension_numbers = #tpu.dot_dimension_numbers<[1], [0], [0], [1], [0, 0, 1, 1], [], []>} : vector<30x30xf32>, vector<30x128xf32>, vector<30x128xf32> -> vector<30x128xf32>
    %24 = arith.addf %23, %18 : vector<30x128xf32>
    %25 = math.tanh %24 : vector<30x128xf32>
    %cst_11 = arith.constant dense<0.000000e+00> : vector<30x128xf32>
    %26 = tpu.matmul %15, %25, %cst_11 {dimension_numbers = #tpu.dot_dimension_numbers<[1], [0], [0], [1], [0, 0, 1, 1], [], []>} : vector<30x30xf32>, vector<30x128xf32>, vector<30x128xf32> -> vector<30x128xf32>
    %27 = arith.addf %26, %18 : vector<30x128xf32>
    %28 = math.tanh %27 : vector<30x128xf32>
    %cst_12 = arith.constant dense<0.000000e+00> : vector<30x128xf32>
    %29 = tpu.matmul %15, %28, %cst_12 {dimension_numbers = #tpu.dot_dimension_numbers<[1], [0], [0], [1], [0, 0, 1, 1], [], []>} : vector<30x30xf32>, vector<30x128xf32>, vector<30x128xf32> -> vector<30x128xf32>
    %30 = arith.addf %29, %18 : vector<30x128xf32>
    %31 = math.tanh %30 : vector<30x128xf32>
    %cst_13 = arith.constant dense<0.000000e+00> : vector<30x128xf32>
    %32 = tpu.matmul %15, %31, %cst_13 {dimension_numbers = #tpu.dot_dimension_numbers<[1], [0], [0], [1], [0, 0, 1, 1], [], []>} : vector<30x30xf32>, vector<30x128xf32>, vector<30x128xf32> -> vector<30x128xf32>
    %33 = arith.addf %32, %18 : vector<30x128xf32>
    %34 = math.tanh %33 : vector<30x128xf32>
    %cst_14 = arith.constant dense<0.000000e+00> : vector<30x128xf32>
    %35 = tpu.matmul %15, %34, %cst_14 {dimension_numbers = #tpu.dot_dimension_numbers<[1], [0], [0], [1], [0, 0, 1, 1], [], []>} : vector<30x30xf32>, vector<30x128xf32>, vector<30x128xf32> -> vector<30x128xf32>
    %36 = arith.addf %35, %18 : vector<30x128xf32>
    %c0_15 = arith.constant 0 : index
    %c0_16 = arith.constant 0 : index
    %37 = vector.load %arg6[%c0_15, %c0_16] : memref<1x30xf32, #tpu.memory_space<vmem>>, vector<1x30xf32>
    %38 = math.tanh %36 : vector<30x128xf32>
    %cst_17 = arith.constant dense<0.000000e+00> : vector<1x128xf32>
    %39 = tpu.matmul %37, %38, %cst_17 {dimension_numbers = #tpu.dot_dimension_numbers<[1], [0], [0], [1], [0, 0, 1, 1], [], []>} : vector<1x30xf32>, vector<30x128xf32>, vector<1x128xf32> -> vector<1x128xf32>
    %c0_18 = arith.constant 0 : index
    %c0_19 = arith.constant 0 : index
    %40 = vector.load %arg7[%c0_18, %c0_19] : memref<1x1xf32, #tpu.memory_space<vmem>>, vector<1x1xf32>
    %41 = vector.broadcast %40 : vector<1x1xf32> to vector<1x128xf32>
    %42 = arith.addf %39, %41 : vector<1x128xf32>
    %c0_20 = arith.constant 0 : index
    %c0_21 = arith.constant 0 : index
    %43 = vector.load %arg8[%c0_20, %c0_21] : memref<1x128xf32, #tpu.memory_space<vmem>>, vector<1x128xf32>
    tpu.vector_store %arg8[%c0_20, %c0_21], %42 {strides = array<i32>} : memref<1x128xf32, #tpu.memory_space<vmem>>, vector<1x128xf32>,
    return
  }
  func.func @transform_0(%arg0: i32) -> (i32, i32) {
    %c0_i32 = arith.constant 0 : i32
    %c0_i32_0 = arith.constant 0 : i32
    return %c0_i32, %arg0 : i32, i32
  }
  func.func @transform_1(%arg0: i32) -> (i32, i32) {
    %c0_i32 = arith.constant 0 : i32
    %c0_i32_0 = arith.constant 0 : i32
    %c0_i32_1 = arith.constant 0 : i32
    return %c0_i32, %c0_i32_0 : i32, i32
  }
  func.func @transform_2(%arg0: i32) -> (i32, i32) {
    %c0_i32 = arith.constant 0 : i32
    %c0_i32_0 = arith.constant 0 : i32
    %c0_i32_1 = arith.constant 0 : i32
    return %c0_i32, %c0_i32_0 : i32, i32
  }
  func.func @transform_3(%arg0: i32) -> (i32, i32) {
    %c0_i32 = arith.constant 0 : i32
    %c0_i32_0 = arith.constant 0 : i32
    %c0_i32_1 = arith.constant 0 : i32
    return %c0_i32, %c0_i32_0 : i32, i32
  }
  func.func @transform_4(%arg0: i32) -> (i32, i32) {
    %c0_i32 = arith.constant 0 : i32
    %c0_i32_0 = arith.constant 0 : i32
    %c0_i32_1 = arith.constant 0 : i32
    return %c0_i32, %c0_i32_0 : i32, i32
  }
  func.func @transform_5(%arg0: i32) -> (i32, i32) {
    %c0_i32 = arith.constant 0 : i32
    %c0_i32_0 = arith.constant 0 : i32
    %c0_i32_1 = arith.constant 0 : i32
    return %c0_i32, %c0_i32_0 : i32, i32
  }
  func.func @transform_6(%arg0: i32) -> (i32, i32) {
    %c0_i32 = arith.constant 0 : i32
    %c0_i32_0 = arith.constant 0 : i32
    %c0_i32_1 = arith.constant 0 : i32
    return %c0_i32, %c0_i32_0 : i32, i32
  }
  func.func @transform_7(%arg0: i32) -> (i32, i32) {
    %c0_i32 = arith.constant 0 : i32
    %c0_i32_0 = arith.constant 0 : i32
    return %c0_i32, %arg0 : i32, i32
  }
}

</mosaic_0001>

<llo_original>
// kernel: tpu_custom_call.1
$region0: #{tpu_custom_call.1}
  #allocation0 [shape = 'u32[]', space=smem, size = 0x4, offset = 0x4, fixed_abs, tag = 'smem constant byte address 0x4 - core index']
  #allocation1 [shape = 'u32[144,128]{1,0:T(1,128)}', space=vmem, size = 0x12000, scoped, tag = 'internal scratch']
  #allocation2 [shape = 'f32[1,1]{1,0:T(1,128)S(1)}', space=vmem, size = 0x200, scoped, tag = 'scoped memory for tpu_custom_call.1']
  %s0 = inlined_call_operand.vmem [shape: f32[2,256], index: 0, kind: input, shape index: {}]
  %s1 = inlined_call_operand.vmem [shape: f32[30,2], index: 1, kind: input, shape index: {}]
  %s2 = inlined_call_operand.vmem [shape: f32[30,1], index: 2, kind: input, shape index: {}]
  %s3 = inlined_call_operand.vmem [shape: f32[30,30], index: 3, kind: input, shape index: {}]
  %s4 = inlined_call_operand.vmem [shape: f32[30,1], index: 4, kind: input, shape index: {}]
  %s5 = inlined_call_operand.vmem [shape: f32[1,30], index: 5, kind: input, shape index: {}]
  %s6 = inlined_call_operand.<no memory space> [shape: f32[1,1], index: 6, kind: input, shape index: {}]
  %s7 = inlined_call_operand.hbm [shape: f32[1,256], index: 7, kind: output, shape index: {}]
  %s8 = sld [smem:[#allocation0]]
  $region61: #{tpu_custom_call.1} parent=0
    _
  %s10 = ssub.s32 1, %s8
  %s11 = scalar_select 0, %s10, %s8
  %v12 = vstv %s6
  %13 = vst [vmem:[#allocation2] sm:$0x1] %v12
  $region1: #{tpu_custom_call.1} parent=0
    #allocation3 [shape = 'u8[1024]{0}', space=vmem, size = 0x400, scoped, tag = 'output window, operand 0']
    #allocation4 [shape = 's32[2]{0}', space=sflag, size = 0x8, scoped, tag = 'scoped memory for tpu_custom_call.1']
    %14 = vsyncpa [#allocation4], 0
    %s15 = scalar_lea.sflag [#allocation4], 1
    %16 = vsyncpa %s15, 0
    loop: start=0, step=1, limit=4
    $region2: #{tpu_custom_call.1} parent=1 // loop_pre_header
      _
    $region3: #{tpu_custom_call.1} parent=1 // loop_header
      %s18 = sphi 0, %s22
      %p19 = scmp.ge.s32.totalorder %s18, 4
      %s28 = sphi 0, %s30
      %s31 = sphi 0, %s28
      %s32 = sphi 0, %s31
      %s48 = sphi 0, %s32
      %s52 = sphi 0, %s52
      %s54 = sphi 0, %s52
      %s55 = sphi 0, %s54
      %s69 = sphi 0, %s55
      %s73 = sphi 0, %s73
      %s75 = sphi 0, %s73
      %s76 = sphi 0, %s75
      %s90 = sphi 0, %s76
      %s94 = sphi 0, %s94
      %s96 = sphi 0, %s94
      %s97 = sphi 0, %s96
      %s111 = sphi 0, %s97
      %s115 = sphi 0, %s115
      %s117 = sphi 0, %s115
      %s118 = sphi 0, %s117
      %s132 = sphi 0, %s118
      %s136 = sphi 0, %s136
      %s138 = sphi 0, %s136
      %s139 = sphi 0, %s138
      %s153 = sphi 0, %s139
      %s157 = sphi 0, %s157
      %s159 = sphi 0, %s157
      %s160 = sphi 0, %s159
      %s174 = sphi 0, %s160
      %s180 = sphi 0, %s182
      %s183 = sphi 0, %s180
      %s184 = sphi 0, %s183
      %s200 = sphi 0, %s184
    $region4: #{tpu_custom_call.1} parent=1 // loop_header_branch
      %21 = sbr.rel (%p19) target = $region8
    $region5: #{tpu_custom_call.1} parent=1 // loop_body
      %s23 = ssub.s32 %s18, 1
      %s24 = ssub.s32 %s18, 2
      %s25 = sadd.s32 %s18, 1
      %s26 = ssub.s32 %s18, %s25
      %p27 = scmp.eq.s32.totalorder %s26, 0
      %s29 = sadd.s32 %s28, 1
      %s30 = scalar_select %p27, %s28, %s29
      %p33 = pneg %p27
      %p34 = scmp.eq.s32.totalorder %s18, 1
      %p35 = por %p33, %p34
      %p36 = scmp.ne.s32.totalorder %s28, %s31
      %p37 = scmp.eq.s32.totalorder %s18, 0
      %p38 = por %p36, %p37
      %p39 = scmp.ne.s32.totalorder %s28, %s31
      %p40 = scmp.eq.s32.totalorder %s23, 1
      %p41 = por %p39, %p40
      %p42 = scmp.ne.s32.totalorder %s31, %s32
      %p43 = scmp.eq.s32.totalorder %s23, 0
      %p44 = por %p42, %p43
      %p45 = scmp.ne.s32.totalorder %s31, %s32
      %p46 = scmp.eq.s32.totalorder %s24, 1
      %p47 = por %p45, %p46
      %p49 = scmp.ne.s32.totalorder %s32, %s48
      %p50 = scmp.eq.s32.totalorder %s24, 0
      %p51 = por %p49, %p50
      %s53 = sadd.s32 %s52, 1
      %p56 = scmp.eq.s32.totalorder %s18, 1
      %p57 = scmp.ne.s32.totalorder %s52, %s54
      %p58 = scmp.eq.s32.totalorder %s18, 0
      %p59 = por %p57, %p58
      %p60 = scmp.ne.s32.totalorder %s52, %s54
      %p61 = scmp.eq.s32.totalorder %s23, 1
      %p62 = por %p60, %p61
      %p63 = scmp.ne.s32.totalorder %s54, %s55
      %p64 = scmp.eq.s32.totalorder %s23, 0
      %p65 = por %p63, %p64
      %p66 = scmp.ne.s32.totalorder %s54, %s55
      %p67 = scmp.eq.s32.totalorder %s24, 1
      %p68 = por %p66, %p67
      %p70 = scmp.ne.s32.totalorder %s55, %s69
      %p71 = scmp.eq.s32.totalorder %s24, 0
      %p72 = por %p70, %p71
      %s74 = sadd.s32 %s73, 1
      %p77 = scmp.eq.s32.totalorder %s18, 1
      %p78 = scmp.ne.s32.totalorder %s73, %s75
      %p79 = scmp.eq.s32.totalorder %s18, 0
      %p80 = por %p78, %p79
      %p81 = scmp.ne.s32.totalorder %s73, %s75
      %p82 = scmp.eq.s32.totalorder %s23, 1
      %p83 = por %p81, %p82
      %p84 = scmp.ne.s32.totalorder %s75, %s76
      %p85 = scmp.eq.s32.totalorder %s23, 0
      %p86 = por %p84, %p85
      %p87 = scmp.ne.s32.totalorder %s75, %s76
      %p88 = scmp.eq.s32.totalorder %s24, 1
      %p89 = por %p87, %p88
      %p91 = scmp.ne.s32.totalorder %s76, %s90
      %p92 = scmp.eq.s32.totalorder %s24, 0
      %p93 = por %p91, %p92
      %s95 = sadd.s32 %s94, 1
      %p98 = scmp.eq.s32.totalorder %s18, 1
      %p99 = scmp.ne.s32.totalorder %s94, %s96
      %p100 = scmp.eq.s32.totalorder %s18, 0
      %p101 = por %p99, %p100
      %p102 = scmp.ne.s32.totalorder %s94, %s96
      %p103 = scmp.eq.s32.totalorder %s23, 1
      %p104 = por %p102, %p103
      %p105 = scmp.ne.s32.totalorder %s96, %s97
      %p106 = scmp.eq.s32.totalorder %s23, 0
      %p107 = por %p105, %p106
      %p108 = scmp.ne.s32.totalorder %s96, %s97
      %p109 = scmp.eq.s32.totalorder %s24, 1
      %p110 = por %p108, %p109
      %p112 = scmp.ne.s32.totalorder %s97, %s111
      %p113 = scmp.eq.s32.totalorder %s24, 0
      %p114 = por %p112, %p113
      %s116 = sadd.s32 %s115, 1
      %p119 = scmp.eq.s32.totalorder %s18, 1
      %p120 = scmp.ne.s32.totalorder %s115, %s117
      %p121 = scmp.eq.s32.totalorder %s18, 0
      %p122 = por %p120, %p121
      %p123 = scmp.ne.s32.totalorder %s115, %s117
      %p124 = scmp.eq.s32.totalorder %s23, 1
      %p125 = por %p123, %p124
      %p126 = scmp.ne.s32.totalorder %s117, %s118
      %p127 = scmp.eq.s32.totalorder %s23, 0
      %p128 = por %p126, %p127
      %p129 = scmp.ne.s32.totalorder %s117, %s118
      %p130 = scmp.eq.s32.totalorder %s24, 1
      %p131 = por %p129, %p130
      %p133 = scmp.ne.s32.totalorder %s118, %s132
      %p134 = scmp.eq.s32.totalorder %s24, 0
      %p135 = por %p133, %p134
      %s137 = sadd.s32 %s136, 1
      %p140 = scmp.eq.s32.totalorder %s18, 1
      %p141 = scmp.ne.s32.totalorder %s136, %s138
      %p142 = scmp.eq.s32.totalorder %s18, 0
      %p143 = por %p141, %p142
      %p144 = scmp.ne.s32.totalorder %s136, %s138
      %p145 = scmp.eq.s32.totalorder %s23, 1
      %p146 = por %p144, %p145
      %p147 = scmp.ne.s32.totalorder %s138, %s139
      %p148 = scmp.eq.s32.totalorder %s23, 0
      %p149 = por %p147, %p148
      %p150 = scmp.ne.s32.totalorder %s138, %s139
      %p151 = scmp.eq.s32.totalorder %s24, 1
      %p152 = por %p150, %p151
      %p154 = scmp.ne.s32.totalorder %s139, %s153
      %p155 = scmp.eq.s32.totalorder %s24, 0
      %p156 = por %p154, %p155
      %s158 = sadd.s32 %s157, 1
      %p161 = scmp.eq.s32.totalorder %s18, 1
      %p162 = scmp.ne.s32.totalorder %s157, %s159
      %p163 = scmp.eq.s32.totalorder %s18, 0
      %p164 = por %p162, %p163
      %p165 = scmp.ne.s32.totalorder %s157, %s159
      %p166 = scmp.eq.s32.totalorder %s23, 1
      %p167 = por %p165, %p166
      %p168 = scmp.ne.s32.totalorder %s159, %s160
      %p169 = scmp.eq.s32.totalorder %s23, 0
      %p170 = por %p168, %p169
      %p171 = scmp.ne.s32.totalorder %s159, %s160
      %p172 = scmp.eq.s32.totalorder %s24, 1
      %p173 = por %p171, %p172
      %p175 = scmp.ne.s32.totalorder %s160, %s174
      %p176 = scmp.eq.s32.totalorder %s24, 0
      %p177 = por %p175, %p176
      %s178 = ssub.s32 %s18, %s25
      %p179 = scmp.eq.s32.totalorder %s178, 0
      %s181 = sadd.s32 %s180, 1
      %s182 = scalar_select %p179, %s180, %s181
      %p185 = pneg %p179
      %p186 = scmp.eq.s32.totalorder %s18, 1
      %p187 = por %p185, %p186
      %p188 = scmp.ne.s32.totalorder %s180, %s183
      %p189 = scmp.eq.s32.totalorder %s18, 0
      %p190 = por %p188, %p189
      %p191 = scmp.ne.s32.totalorder %s180, %s183
      %p192 = scmp.eq.s32.totalorder %s23, 1
      %p193 = por %p191, %p192
      %p194 = scmp.ne.s32.totalorder %s183, %s184
      %p195 = scmp.eq.s32.totalorder %s23, 0
      %p196 = por %p194, %p195
      %p197 = scmp.ne.s32.totalorder %s183, %s184
      %p198 = scmp.eq.s32.totalorder %s24, 1
      %p199 = por %p197, %p198
      %p201 = scmp.ne.s32.totalorder %s184, %s200
      %p202 = scmp.eq.s32.totalorder %s24, 0
      %p203 = por %p201, %p202
      %p204 = scmp.le.s32.totalorder 1, %s18
      %p205 = scmp.lt.s32.totalorder %s18, 3
      %p206 = pnand %p204, %p205
      %p207 = pneg %p206
      // Predicated region
      $region9: #{tpu_custom_call.1} parent=5 // pred_check
        _
      $region10: #{tpu_custom_call.1} parent=5 // pred_check_branch
        %209 = sbr.rel (%p206) target = $region12
      $region11: #{tpu_custom_call.1} parent=5 // pred_region
        %s210 = ssub.s32 %s18, 1
        // Predicated region
        $region13: #{tpu_custom_call.1} parent=11 // pred_check
          %p211 = pneg %p65
        $region14: #{tpu_custom_call.1} parent=11 // pred_check_branch
          %213 = sbr.rel (%p211) target = $region16
        $region15: #{tpu_custom_call.1} parent=11 // pred_region
          _
        $region16: #{tpu_custom_call.1} parent=11 // pred_fallthru
          _
        // Predicated region
        $region17: #{tpu_custom_call.1} parent=11 // pred_check
          %p214 = pneg %p86
        $region18: #{tpu_custom_call.1} parent=11 // pred_check_branch
          %216 = sbr.rel (%p214) target = $region20
        $region19: #{tpu_custom_call.1} parent=11 // pred_region
          _
        $region20: #{tpu_custom_call.1} parent=11 // pred_fallthru
          _
        // Predicated region
        $region21: #{tpu_custom_call.1} parent=11 // pred_check
          %p217 = pneg %p107
        $region22: #{tpu_custom_call.1} parent=11 // pred_check_branch
          %219 = sbr.rel (%p217) target = $region24
        $region23: #{tpu_custom_call.1} parent=11 // pred_region
          _
        $region24: #{tpu_custom_call.1} parent=11 // pred_fallthru
          _
        // Predicated region
        $region25: #{tpu_custom_call.1} parent=11 // pred_check
          %p220 = pneg %p128
        $region26: #{tpu_custom_call.1} parent=11 // pred_check_branch
          %222 = sbr.rel (%p220) target = $region28
        $region27: #{tpu_custom_call.1} parent=11 // pred_region
          _
        $region28: #{tpu_custom_call.1} parent=11 // pred_fallthru
          _
        // Predicated region
        $region29: #{tpu_custom_call.1} parent=11 // pred_check
          %p223 = pneg %p149
        $region30: #{tpu_custom_call.1} parent=11 // pred_check_branch
          %225 = sbr.rel (%p223) target = $region32
        $region31: #{tpu_custom_call.1} parent=11 // pred_region
          _
        $region32: #{tpu_custom_call.1} parent=11 // pred_fallthru
          _
        // Predicated region
        $region33: #{tpu_custom_call.1} parent=11 // pred_check
          %p226 = pneg %p170
        $region34: #{tpu_custom_call.1} parent=11 // pred_check_branch
          %228 = sbr.rel (%p226) target = $region36
        $region35: #{tpu_custom_call.1} parent=11 // pred_region
          _
        $region36: #{tpu_custom_call.1} parent=11 // pred_fallthru
          _
      $region12: #{tpu_custom_call.1} parent=5 // pred_fallthru
        _
      %p229 = scmp.lt.s32.totalorder %s18, 2
      // Predicated region
      $region37: #{tpu_custom_call.1} parent=5 // pred_check
        %p230 = pneg %p229
      $region38: #{tpu_custom_call.1} parent=5 // pred_check_branch
        %232 = sbr.rel (%p230) target = $region40
      $region39: #{tpu_custom_call.1} parent=5 // pred_region
        // Predicated region
        $region41: #{tpu_custom_call.1} parent=39 // pred_check
          %p233 = pneg %p38
        $region42: #{tpu_custom_call.1} parent=39 // pred_check_branch
          %235 = sbr.rel (%p233) target = $region44
        $region43: #{tpu_custom_call.1} parent=39 // pred_region
          %p236 = scmp.lt.s32.totalorder %s18, 1
          %s237 = scalar_select %p236, %s18, 1
          %s238 = smul.addr %s237, 2
          %s239 = scalar_lea.vmem %s0, %s238
        $region44: #{tpu_custom_call.1} parent=39 // pred_fallthru
          _
      $region40: #{tpu_custom_call.1} parent=5 // pred_fallthru
        _
      %p240 = scmp.le.s32.totalorder 1, %s18
      %p241 = scmp.lt.s32.totalorder %s18, 3
      %p242 = pnand %p240, %p241
      %p243 = pneg %p242
      // Predicated region
      $region45: #{tpu_custom_call.1} parent=5 // pred_check
        _
      $region46: #{tpu_custom_call.1} parent=5 // pred_check_branch
        %245 = sbr.rel (%p242) target = $region48
      $region47: #{tpu_custom_call.1} parent=5 // pred_region
        %s246 = ssub.s32 %s18, 1
        %p247 = scmp.lt.s32.totalorder %s23, 1
        %s248 = scalar_select %p247, %s23, 1
        %s249 = smul.addr %s248, 2
        %s250 = scalar_lea.vmem %s0, %s249
        %p251 = pneg %p44
        %p252 = pneg %p41
        %p253 = pneg %p65
        %p254 = pneg %p62
        %p255 = pneg %p86
        %p256 = pneg %p83
        %p257 = pneg %p107
        %p258 = pneg %p104
        %p259 = pneg %p128
        %p260 = pneg %p125
        %p261 = pneg %p149
        %p262 = pneg %p146
        %p263 = pneg %p170
        %p264 = pneg %p167
        %p265 = pneg %p196
        %p266 = pneg %p193
        %s267 = sand.u32 %s183, 1
        %s268 = scalar_lea.sflag [#allocation4], %s267
        %s269 = sand.u32 %s183, 1
        %s270 = scalar_lea.vmem [#allocation3], %s269
        %p271 = scmp.lt.s32.totalorder %s23, 1
        %s272 = scalar_select %p271, %s23, 1
        %s273 = smul.addr %s272, 2
        %s274 = scalar_lea.vmem %s0, %s273
        %v275 = vld [vmem:[%s274] sm:$0x3]
        %v276 = vld [vmem:[%s1] sm:$0xff]
        %v277 = vld [vmem:[%s1 + $0x8] sm:$0xff]
        %v278 = vld [vmem:[%s1 + $0x10] sm:$0xff]
        %v279 = vld [vmem:[%s1 + $0x18] sm:$0x3f]
        %281 = vset.pattern.permute.xlu0 0
        %282 = vperm.xlu0 %281, %v276
        %v283 = vpop.permute.xlu0 %282
        %286 = vset.pattern.permute.xlu0 0
        %287 = vperm.xlu0 %286, %v277
        %v288 = vpop.permute.xlu0 %287
        %291 = vset.pattern.permute.xlu0 0
        %292 = vperm.xlu0 %291, %v278
        %v293 = vpop.permute.xlu0 %292
        %296 = vset.pattern.permute.xlu0 0
        %297 = vperm.xlu0 %296, %v279
        %v298 = vpop.permute.xlu0 %297
        %v300 = vlaneseq
        %v301 = vshrl.u32 %v300, 7
        %v302 = vsub.s32 0, %v301
        %v303 = vrot.slane %v275, %v302
        %v304 = vmul.f32 %v283, %v303
        %v305 = vmul.f32 %v288, %v303
        %v306 = vmul.f32 %v293, %v303
        %v307 = vmul.f32 %v298, %v303
        %308 = vset.pattern.permute.xlu0 1
        %309 = vperm.xlu0 %308, %v276
        %v310 = vpop.permute.xlu0 %309
        %312 = vset.pattern.permute.xlu0 1
        %313 = vperm.xlu0 %312, %v277
        %v314 = vpop.permute.xlu0 %313
        %316 = vset.pattern.permute.xlu0 1
        %317 = vperm.xlu0 %316, %v278
        %v318 = vpop.permute.xlu0 %317
        %320 = vset.pattern.permute.xlu0 1
        %321 = vperm.xlu0 %320, %v279
        %v322 = vpop.permute.xlu0 %321
        %v324 = vlaneseq
        %v325 = vshrl.u32 %v324, 7
        %v326 = vsub.s32 1, %v325
        %v327 = vrot.slane %v275, %v326
        %v328 = vmul.f32 %v310, %v327
        %v329 = vmul.f32 %v314, %v327
        %v330 = vmul.f32 %v318, %v327
        %v331 = vmul.f32 %v322, %v327
        %v332 = vadd.f32 %v304, %v328
        %v333 = vadd.f32 %v305, %v329
        %v334 = vadd.f32 %v306, %v330
        %v335 = vadd.f32 %v307, %v331
        %v336 = vld [vmem:[%s2] sm:$0xff]
        %v337 = vld [vmem:[%s2 + $0x8] sm:$0xff]
        %v338 = vld [vmem:[%s2 + $0x10] sm:$0xff]
        %v339 = vld [vmem:[%s2 + $0x18] sm:$0x3f]
        %341 = vset.pattern.permute.xlu0 0
        %342 = vperm.xlu0 %341, %v336
        %v343 = vpop.permute.xlu0 %342
        %346 = vset.pattern.permute.xlu0 0
        %347 = vperm.xlu0 %346, %v337
        %v348 = vpop.permute.xlu0 %347
        %351 = vset.pattern.permute.xlu0 0
        %352 = vperm.xlu0 %351, %v338
        %v353 = vpop.permute.xlu0 %352
        %356 = vset.pattern.permute.xlu0 0
        %357 = vperm.xlu0 %356, %v339
        %v358 = vpop.permute.xlu0 %357
        %v360 = vadd.f32 %v332, %v343
        %v361 = vadd.f32 %v333, %v348
        %v362 = vadd.f32 %v334, %v353
        %v363 = vadd.f32 %v335, %v358
        %v364 = vld [vmem:[%s3] sm:$0xff]
        %v365 = vld [vmem:[%s3 + $0x8] sm:$0xff]
        %v366 = vld [vmem:[%s3 + $0x10] sm:$0xff]
        %v367 = vld [vmem:[%s3 + $0x18] sm:$0x3f]
        %v368 = vld [vmem:[%s4] sm:$0xff]
        %v369 = vld [vmem:[%s4 + $0x8] sm:$0xff]
        %v370 = vld [vmem:[%s4 + $0x10] sm:$0xff]
        %v371 = vld [vmem:[%s4 + $0x18] sm:$0x3f]
        %373 = vset.pattern.permute.xlu0 0
        %374 = vperm.xlu0 %373, %v368
        %v375 = vpop.permute.xlu0 %374
        %378 = vset.pattern.permute.xlu0 0
        %379 = vperm.xlu0 %378, %v369
        %v380 = vpop.permute.xlu0 %379
        %383 = vset.pattern.permute.xlu0 0
        %384 = vperm.xlu0 %383, %v370
        %v385 = vpop.permute.xlu0 %384
        %388 = vset.pattern.permute.xlu0 0
        %389 = vperm.xlu0 %388, %v371
        %v390 = vpop.permute.xlu0 %389
        %v392 = vtanh.pop %v360
        %v393 = vtanh.pop %v361
        %v394 = vtanh.pop %v362
        %v395 = vtanh.pop %v363
        %vm396 = vcmask 244736
        %v398 = vsel %vm396, %v364, 0
        %v401 = vsel %vm396, %v365, 0
        %v404 = vsel %vm396, %v366, 0
        %v407 = vsel %vm396, %v367, 0
        %vm409 = vcmask 1045504
        %v411 = vsel %vm409, %v395, 0
        %413 = vmatprep.subr.mxu0 0.0
        %414 = vmatpush1.msra.mxu0 %v392
        %415 = vmatprep.subr.mxu0 0.0
        %416 = vmatpush1.msra.mxu0 %v393
        %417 = vmatprep.subr.mxu0 0.0
        %418 = vmatpush1.msra.mxu0 %v394
        %419 = vmatprep.subr.mxu0 0.0
        %420 = vmatpush1.msra.mxu0 %v411
        %421 = vmatprep.subr.mxu0 0.0
        %422 = vmatpush1.msra.mxu0 0.0
        %423 = vmatprep.subr.mxu0 0.0
        %424 = vmatpush1.msra.mxu0 0.0
        %425 = vmatprep.subr.mxu0 0.0
        %426 = vmatpush1.msra.mxu0 0.0
        %427 = vmatprep.subr.mxu0 0.0
        %428 = vmatpush1.msra.mxu0 0.0
        %429 = vmatprep.subr.mxu0 0.0
        %430 = vmatpush1.msra.mxu0 0.0
        %431 = vmatprep.subr.mxu0 0.0
        %432 = vmatpush1.msra.mxu0 0.0
        %433 = vmatprep.subr.mxu0 0.0
        %434 = vmatpush1.msra.mxu0 0.0
        %435 = vmatprep.subr.mxu0 0.0
        %436 = vmatpush1.msra.mxu0 0.0
        %437 = vmatprep.subr.mxu0 0.0
        %438 = vmatpush1.msra.mxu0 0.0
        %439 = vmatprep.subr.mxu0 0.0
        %440 = vmatpush1.msra.mxu0 0.0
        %441 = vmatprep.subr.mxu0 0.0
        %442 = vmatpush1.msra.mxu0 0.0
        %443 = vmatprep.subr.mxu0 0.0
        %444 = vmatpush1.msra.mxu0 0.0
        %445 = vmatprep.subr.mxu0 0.0
        %446 = vmatpush1.msra.mxu0 0.0
        %447 = vmatprep.subr.mxu0 0.0
        %448 = vmatpush1.msra.mxu0 0.0
        %449 = vmatprep.subr.mxu0 0.0
        %450 = vmatpush1.msra.mxu0 0.0
        %451 = vmatprep.subr.mxu0 0.0
        %452 = vmatpush1.msra.mxu0 0.0
        %453 = vmatprep.subr.mxu0 0.0
        %454 = vmatpush1.msra.mxu0 0.0
        %455 = vmatprep.subr.mxu0 0.0
        %456 = vmatpush1.msra.mxu0 0.0
        %457 = vmatprep.subr.mxu0 0.0
        %458 = vmatpush1.msra.mxu0 0.0
        %459 = vmatprep.subr.mxu0 0.0
        %460 = vmatpush1.msra.mxu0 0.0
        %461 = vmatprep.subr.mxu0 0.0
        %462 = vmatpush1.msra.mxu0 0.0
        %463 = vmatprep.subr.mxu0 0.0
        %464 = vmatpush1.msra.mxu0 0.0
        %465 = vmatprep.subr.mxu0 0.0
        %466 = vmatpush1.msra.mxu0 0.0
        %467 = vmatprep.subr.mxu0 0.0
        %468 = vmatpush1.msra.mxu0 0.0
        %469 = vmatprep.subr.mxu0 0.0
        %470 = vmatpush1.msra.mxu0 0.0
        %471 = vmatprep.subr.mxu0 0.0
        %472 = vmatpush1.msra.mxu0 0.0
        %473 = vmatprep.subr.mxu0 0.0
        %474 = vmatpush1.msra.mxu0 0.0
        %475 = vmatprep.subr.mxu0 0.0
        %476 = vmatpush1.msra.mxu0 0.0
        %477 = vmatprep.mubr.f32.mxu0 0.0
        %478 = vmatmul.mubr.f32.gmra.mrb[0].mxu0 %v398
        %v479 = vpop.f32.mrb[0].mxu0
        %v480 = vadd.f32 %v375, %v479
        %v481 = vpop.f32.mrb[0].mxu0
        %482 = vmatprep.mubr.f32.mxu0 0.0
        %483 = vmatmul.mubr.f32.gmra.mrb[0].mxu0 %v401
        %v484 = vpop.f32.mrb[0].mxu0
        %v485 = vadd.f32 %v380, %v484
        %v486 = vpop.f32.mrb[0].mxu0
        %487 = vmatprep.mubr.f32.mxu0 0.0
        %488 = vmatmul.mubr.f32.gmra.mrb[0].mxu0 %v404
        %v489 = vpop.f32.mrb[0].mxu0
        %v490 = vadd.f32 %v385, %v489
        %v491 = vpop.f32.mrb[0].mxu0
        %492 = vmatprep.mubr.f32.mxu0 0.0
        %493 = vmatmul.mubr.f32.gmra.mrb[0].mxu0 %v407
        %v494 = vpop.f32.mrb[0].mxu0
        %v495 = vadd.f32 %v390, %v494
        %v496 = vpop.f32.mrb[0].mxu0
        %497 = vdwg.mxu0
        %v498 = vtanh.pop %v480
        %v499 = vtanh.pop %v485
        %v500 = vtanh.pop %v490
        %v501 = vtanh.pop %v495
        %v503 = vsel %vm409, %v501, 0
        %505 = vmatprep.subr.mxu0 0.0
        %506 = vmatpush1.msra.mxu0 %v498
        %507 = vmatprep.subr.mxu0 0.0
        %508 = vmatpush1.msra.mxu0 %v499
        %509 = vmatprep.subr.mxu0 0.0
        %510 = vmatpush1.msra.mxu0 %v500
        %511 = vmatprep.subr.mxu0 0.0
        %512 = vmatpush1.msra.mxu0 %v503
        %513 = vmatprep.subr.mxu0 0.0
        %514 = vmatpush1.msra.mxu0 0.0
        %515 = vmatprep.subr.mxu0 0.0
        %516 = vmatpush1.msra.mxu0 0.0
        %517 = vmatprep.subr.mxu0 0.0
        %518 = vmatpush1.msra.mxu0 0.0
        %519 = vmatprep.subr.mxu0 0.0
        %520 = vmatpush1.msra.mxu0 0.0
        %521 = vmatprep.subr.mxu0 0.0
        %522 = vmatpush1.msra.mxu0 0.0
        %523 = vmatprep.subr.mxu0 0.0
        %524 = vmatpush1.msra.mxu0 0.0
        %525 = vmatprep.subr.mxu0 0.0
        %526 = vmatpush1.msra.mxu0 0.0
        %527 = vmatprep.subr.mxu0 0.0
        %528 = vmatpush1.msra.mxu0 0.0
        %529 = vmatprep.subr.mxu0 0.0
        %530 = vmatpush1.msra.mxu0 0.0
        %531 = vmatprep.subr.mxu0 0.0
        %532 = vmatpush1.msra.mxu0 0.0
        %533 = vmatprep.subr.mxu0 0.0
        %534 = vmatpush1.msra.mxu0 0.0
        %535 = vmatprep.subr.mxu0 0.0
        %536 = vmatpush1.msra.mxu0 0.0
        %537 = vmatprep.subr.mxu0 0.0
        %538 = vmatpush1.msra.mxu0 0.0
        %539 = vmatprep.subr.mxu0 0.0
        %540 = vmatpush1.msra.mxu0 0.0
        %541 = vmatprep.subr.mxu0 0.0
        %542 = vmatpush1.msra.mxu0 0.0
        %543 = vmatprep.subr.mxu0 0.0
        %544 = vmatpush1.msra.mxu0 0.0
        %545 = vmatprep.subr.mxu0 0.0
        %546 = vmatpush1.msra.mxu0 0.0
        %547 = vmatprep.subr.mxu0 0.0
        %548 = vmatpush1.msra.mxu0 0.0
        %549 = vmatprep.subr.mxu0 0.0
        %550 = vmatpush1.msra.mxu0 0.0
        %551 = vmatprep.subr.mxu0 0.0
        %552 = vmatpush1.msra.mxu0 0.0
        %553 = vmatprep.subr.mxu0 0.0
        %554 = vmatpush1.msra.mxu0 0.0
        %555 = vmatprep.subr.mxu0 0.0
        %556 = vmatpush1.msra.mxu0 0.0
        %557 = vmatprep.subr.mxu0 0.0
        %558 = vmatpush1.msra.mxu0 0.0
        %559 = vmatprep.subr.mxu0 0.0
        %560 = vmatpush1.msra.mxu0 0.0
        %561 = vmatprep.subr.mxu0 0.0
        %562 = vmatpush1.msra.mxu0 0.0
        %563 = vmatprep.subr.mxu0 0.0
        %564 = vmatpush1.msra.mxu0 0.0
        %565 = vmatprep.subr.mxu0 0.0
        %566 = vmatpush1.msra.mxu0 0.0
        %567 = vmatprep.subr.mxu0 0.0
        %568 = vmatpush1.msra.mxu0 0.0
        %569 = vmatprep.mubr.f32.mxu0 0.0
        %570 = vmatmul.mubr.f32.gmra.mrb[0].mxu0 %v398
        %v571 = vpop.f32.mrb[0].mxu0
        %v572 = vadd.f32 %v375, %v571
        %v573 = vpop.f32.mrb[0].mxu0
        %574 = vmatprep.mubr.f32.mxu0 0.0
        %575 = vmatmul.mubr.f32.gmra.mrb[0].mxu0 %v401
        %v576 = vpop.f32.mrb[0].mxu0
        %v577 = vadd.f32 %v380, %v576
        %v578 = vpop.f32.mrb[0].mxu0
        %579 = vmatprep.mubr.f32.mxu0 0.0
        %580 = vmatmul.mubr.f32.gmra.mrb[0].mxu0 %v404
        %v581 = vpop.f32.mrb[0].mxu0
        %v582 = vadd.f32 %v385, %v581
        %v583 = vpop.f32.mrb[0].mxu0
        %584 = vmatprep.mubr.f32.mxu0 0.0
        %585 = vmatmul.mubr.f32.gmra.mrb[0].mxu0 %v407
        %v586 = vpop.f32.mrb[0].mxu0
        %v587 = vadd.f32 %v390, %v586
        %v588 = vpop.f32.mrb[0].mxu0
        %589 = vdwg.mxu0
        %v590 = vtanh.pop %v572
        %v591 = vtanh.pop %v577
        %v592 = vtanh.pop %v582
        %v593 = vtanh.pop %v587
        %v595 = vsel %vm409, %v593, 0
        %597 = vmatprep.subr.mxu0 0.0
        %598 = vmatpush1.msra.mxu0 %v590
        %599 = vmatprep.subr.mxu0 0.0
        %600 = vmatpush1.msra.mxu0 %v591
        %601 = vmatprep.subr.mxu0 0.0
        %602 = vmatpush1.msra.mxu0 %v592
        %603 = vmatprep.subr.mxu0 0.0
        %604 = vmatpush1.msra.mxu0 %v595
        %605 = vmatprep.subr.mxu0 0.0
        %606 = vmatpush1.msra.mxu0 0.0
        %607 = vmatprep.subr.mxu0 0.0
        %608 = vmatpush1.msra.mxu0 0.0
        %609 = vmatprep.subr.mxu0 0.0
        %610 = vmatpush1.msra.mxu0 0.0
        %611 = vmatprep.subr.mxu0 0.0
        %612 = vmatpush1.msra.mxu0 0.0
        %613 = vmatprep.subr.mxu0 0.0
        %614 = vmatpush1.msra.mxu0 0.0
        %615 = vmatprep.subr.mxu0 0.0
        %616 = vmatpush1.msra.mxu0 0.0
        %617 = vmatprep.subr.mxu0 0.0
        %618 = vmatpush1.msra.mxu0 0.0
        %619 = vmatprep.subr.mxu0 0.0
        %620 = vmatpush1.msra.mxu0 0.0
        %621 = vmatprep.subr.mxu0 0.0
        %622 = vmatpush1.msra.mxu0 0.0
        %623 = vmatprep.subr.mxu0 0.0
        %624 = vmatpush1.msra.mxu0 0.0
        %625 = vmatprep.subr.mxu0 0.0
        %626 = vmatpush1.msra.mxu0 0.0
        %627 = vmatprep.subr.mxu0 0.0
        %628 = vmatpush1.msra.mxu0 0.0
        %629 = vmatprep.subr.mxu0 0.0
        %630 = vmatpush1.msra.mxu0 0.0
        %631 = vmatprep.subr.mxu0 0.0
        %632 = vmatpush1.msra.mxu0 0.0
        %633 = vmatprep.subr.mxu0 0.0
        %634 = vmatpush1.msra.mxu0 0.0
        %635 = vmatprep.subr.mxu0 0.0
        %636 = vmatpush1.msra.mxu0 0.0
        %637 = vmatprep.subr.mxu0 0.0
        %638 = vmatpush1.msra.mxu0 0.0
        %639 = vmatprep.subr.mxu0 0.0
        %640 = vmatpush1.msra.mxu0 0.0
        %641 = vmatprep.subr.mxu0 0.0
        %642 = vmatpush1.msra.mxu0 0.0
        %643 = vmatprep.subr.mxu0 0.0
        %644 = vmatpush1.msra.mxu0 0.0
        %645 = vmatprep.subr.mxu0 0.0
        %646 = vmatpush1.msra.mxu0 0.0
        %647 = vmatprep.subr.mxu0 0.0
        %648 = vmatpush1.msra.mxu0 0.0
        %649 = vmatprep.subr.mxu0 0.0
        %650 = vmatpush1.msra.mxu0 0.0
        %651 = vmatprep.subr.mxu0 0.0
        %652 = vmatpush1.msra.mxu0 0.0
        %653 = vmatprep.subr.mxu0 0.0
        %654 = vmatpush1.msra.mxu0 0.0
        %655 = vmatprep.subr.mxu0 0.0
        %656 = vmatpush1.msra.mxu0 0.0
        %657 = vmatprep.subr.mxu0 0.0
        %658 = vmatpush1.msra.mxu0 0.0
        %659 = vmatprep.subr.mxu0 0.0
        %660 = vmatpush1.msra.mxu0 0.0
        %661 = vmatprep.mubr.f32.mxu0 0.0
        %662 = vmatmul.mubr.f32.gmra.mrb[0].mxu0 %v398
        %v663 = vpop.f32.mrb[0].mxu0
        %v664 = vadd.f32 %v375, %v663
        %v665 = vpop.f32.mrb[0].mxu0
        %666 = vmatprep.mubr.f32.mxu0 0.0
        %667 = vmatmul.mubr.f32.gmra.mrb[0].mxu0 %v401
        %v668 = vpop.f32.mrb[0].mxu0
        %v669 = vadd.f32 %v380, %v668
        %v670 = vpop.f32.mrb[0].mxu0
        %671 = vmatprep.mubr.f32.mxu0 0.0
        %672 = vmatmul.mubr.f32.gmra.mrb[0].mxu0 %v404
        %v673 = vpop.f32.mrb[0].mxu0
        %v674 = vadd.f32 %v385, %v673
        %v675 = vpop.f32.mrb[0].mxu0
        %676 = vmatprep.mubr.f32.mxu0 0.0
        %677 = vmatmul.mubr.f32.gmra.mrb[0].mxu0 %v407
        %v678 = vpop.f32.mrb[0].mxu0
        %v679 = vadd.f32 %v390, %v678
        %v680 = vpop.f32.mrb[0].mxu0
        %681 = vdwg.mxu0
        %v682 = vtanh.pop %v664
        %v683 = vtanh.pop %v669
        %v684 = vtanh.pop %v674
        %v685 = vtanh.pop %v679
        %v687 = vsel %vm409, %v685, 0
        %689 = vmatprep.subr.mxu0 0.0
        %690 = vmatpush1.msra.mxu0 %v682
        %691 = vmatprep.subr.mxu0 0.0
        %692 = vmatpush1.msra.mxu0 %v683
        %693 = vmatprep.subr.mxu0 0.0
        %694 = vmatpush1.msra.mxu0 %v684
        %695 = vmatprep.subr.mxu0 0.0
        %696 = vmatpush1.msra.mxu0 %v687
        %697 = vmatprep.subr.mxu0 0.0
        %698 = vmatpush1.msra.mxu0 0.0
        %699 = vmatprep.subr.mxu0 0.0
        %700 = vmatpush1.msra.mxu0 0.0
        %701 = vmatprep.subr.mxu0 0.0
        %702 = vmatpush1.msra.mxu0 0.0
        %703 = vmatprep.subr.mxu0 0.0
        %704 = vmatpush1.msra.mxu0 0.0
        %705 = vmatprep.subr.mxu0 0.0
        %706 = vmatpush1.msra.mxu0 0.0
        %707 = vmatprep.subr.mxu0 0.0
        %708 = vmatpush1.msra.mxu0 0.0
        %709 = vmatprep.subr.mxu0 0.0
        %710 = vmatpush1.msra.mxu0 0.0
        %711 = vmatprep.subr.mxu0 0.0
        %712 = vmatpush1.msra.mxu0 0.0
        %713 = vmatprep.subr.mxu0 0.0
        %714 = vmatpush1.msra.mxu0 0.0
        %715 = vmatprep.subr.mxu0 0.0
        %716 = vmatpush1.msra.mxu0 0.0
        %717 = vmatprep.subr.mxu0 0.0
        %718 = vmatpush1.msra.mxu0 0.0
        %719 = vmatprep.subr.mxu0 0.0
        %720 = vmatpush1.msra.mxu0 0.0
        %721 = vmatprep.subr.mxu0 0.0
        %722 = vmatpush1.msra.mxu0 0.0
        %723 = vmatprep.subr.mxu0 0.0
        %724 = vmatpush1.msra.mxu0 0.0
        %725 = vmatprep.subr.mxu0 0.0
        %726 = vmatpush1.msra.mxu0 0.0
        %727 = vmatprep.subr.mxu0 0.0
        %728 = vmatpush1.msra.mxu0 0.0
        %729 = vmatprep.subr.mxu0 0.0
        %730 = vmatpush1.msra.mxu0 0.0
        %731 = vmatprep.subr.mxu0 0.0
        %732 = vmatpush1.msra.mxu0 0.0
        %733 = vmatprep.subr.mxu0 0.0
        %734 = vmatpush1.msra.mxu0 0.0
        %735 = vmatprep.subr.mxu0 0.0
        %736 = vmatpush1.msra.mxu0 0.0
        %737 = vmatprep.subr.mxu0 0.0
        %738 = vmatpush1.msra.mxu0 0.0
        %739 = vmatprep.subr.mxu0 0.0
        %740 = vmatpush1.msra.mxu0 0.0
        %741 = vmatprep.subr.mxu0 0.0
        %742 = vmatpush1.msra.mxu0 0.0
        %743 = vmatprep.subr.mxu0 0.0
        %744 = vmatpush1.msra.mxu0 0.0
        %745 = vmatprep.subr.mxu0 0.0
        %746 = vmatpush1.msra.mxu0 0.0
        %747 = vmatprep.subr.mxu0 0.0
        %748 = vmatpush1.msra.mxu0 0.0
        %749 = vmatprep.subr.mxu0 0.0
        %750 = vmatpush1.msra.mxu0 0.0
        %751 = vmatprep.subr.mxu0 0.0
        %752 = vmatpush1.msra.mxu0 0.0
        %753 = vmatprep.mubr.f32.mxu0 0.0
        %754 = vmatmul.mubr.f32.gmra.mrb[0].mxu0 %v398
        %v755 = vpop.f32.mrb[0].mxu0
        %v756 = vadd.f32 %v375, %v755
        %v757 = vpop.f32.mrb[0].mxu0
        %758 = vmatprep.mubr.f32.mxu0 0.0
        %759 = vmatmul.mubr.f32.gmra.mrb[0].mxu0 %v401
        %v760 = vpop.f32.mrb[0].mxu0
        %v761 = vadd.f32 %v380, %v760
        %v762 = vpop.f32.mrb[0].mxu0
        %763 = vmatprep.mubr.f32.mxu0 0.0
        %764 = vmatmul.mubr.f32.gmra.mrb[0].mxu0 %v404
        %v765 = vpop.f32.mrb[0].mxu0
        %v766 = vadd.f32 %v385, %v765
        %v767 = vpop.f32.mrb[0].mxu0
        %768 = vmatprep.mubr.f32.mxu0 0.0
        %769 = vmatmul.mubr.f32.gmra.mrb[0].mxu0 %v407
        %v770 = vpop.f32.mrb[0].mxu0
        %v771 = vadd.f32 %v390, %v770
        %v772 = vpop.f32.mrb[0].mxu0
        %773 = vdwg.mxu0
        %v774 = vtanh.pop %v756
        %v775 = vtanh.pop %v761
        %v776 = vtanh.pop %v766
        %v777 = vtanh.pop %v771
        %v779 = vsel %vm409, %v777, 0
        %781 = vmatprep.subr.mxu0 0.0
        %782 = vmatpush1.msra.mxu0 %v774
        %783 = vmatprep.subr.mxu0 0.0
        %784 = vmatpush1.msra.mxu0 %v775
        %785 = vmatprep.subr.mxu0 0.0
        %786 = vmatpush1.msra.mxu0 %v776
        %787 = vmatprep.subr.mxu0 0.0
        %788 = vmatpush1.msra.mxu0 %v779
        %789 = vmatprep.subr.mxu0 0.0
        %790 = vmatpush1.msra.mxu0 0.0
        %791 = vmatprep.subr.mxu0 0.0
        %792 = vmatpush1.msra.mxu0 0.0
        %793 = vmatprep.subr.mxu0 0.0
        %794 = vmatpush1.msra.mxu0 0.0
        %795 = vmatprep.subr.mxu0 0.0
        %796 = vmatpush1.msra.mxu0 0.0
        %797 = vmatprep.subr.mxu0 0.0
        %798 = vmatpush1.msra.mxu0 0.0
        %799 = vmatprep.subr.mxu0 0.0
        %800 = vmatpush1.msra.mxu0 0.0
        %801 = vmatprep.subr.mxu0 0.0
        %802 = vmatpush1.msra.mxu0 0.0
        %803 = vmatprep.subr.mxu0 0.0
        %804 = vmatpush1.msra.mxu0 0.0
        %805 = vmatprep.subr.mxu0 0.0
        %806 = vmatpush1.msra.mxu0 0.0
        %807 = vmatprep.subr.mxu0 0.0
        %808 = vmatpush1.msra.mxu0 0.0
        %809 = vmatprep.subr.mxu0 0.0
        %810 = vmatpush1.msra.mxu0 0.0
        %811 = vmatprep.subr.mxu0 0.0
        %812 = vmatpush1.msra.mxu0 0.0
        %813 = vmatprep.subr.mxu0 0.0
        %814 = vmatpush1.msra.mxu0 0.0
        %815 = vmatprep.subr.mxu0 0.0
        %816 = vmatpush1.msra.mxu0 0.0
        %817 = vmatprep.subr.mxu0 0.0
        %818 = vmatpush1.msra.mxu0 0.0
        %819 = vmatprep.subr.mxu0 0.0
        %820 = vmatpush1.msra.mxu0 0.0
        %821 = vmatprep.subr.mxu0 0.0
        %822 = vmatpush1.msra.mxu0 0.0
        %823 = vmatprep.subr.mxu0 0.0
        %824 = vmatpush1.msra.mxu0 0.0
        %825 = vmatprep.subr.mxu0 0.0
        %826 = vmatpush1.msra.mxu0 0.0
        %827 = vmatprep.subr.mxu0 0.0
        %828 = vmatpush1.msra.mxu0 0.0
        %829 = vmatprep.subr.mxu0 0.0
        %830 = vmatpush1.msra.mxu0 0.0
        %831 = vmatprep.subr.mxu0 0.0
        %832 = vmatpush1.msra.mxu0 0.0
        %833 = vmatprep.subr.mxu0 0.0
        %834 = vmatpush1.msra.mxu0 0.0
        %835 = vmatprep.subr.mxu0 0.0
        %836 = vmatpush1.msra.mxu0 0.0
        %837 = vmatprep.subr.mxu0 0.0
        %838 = vmatpush1.msra.mxu0 0.0
        %839 = vmatprep.subr.mxu0 0.0
        %840 = vmatpush1.msra.mxu0 0.0
        %841 = vmatprep.subr.mxu0 0.0
        %842 = vmatpush1.msra.mxu0 0.0
        %843 = vmatprep.subr.mxu0 0.0
        %844 = vmatpush1.msra.mxu0 0.0
        %845 = vmatprep.mubr.f32.mxu0 0.0
        %846 = vmatmul.mubr.f32.gmra.mrb[0].mxu0 %v398
        %v847 = vpop.f32.mrb[0].mxu0
        %v848 = vadd.f32 %v375, %v847
        %v849 = vpop.f32.mrb[0].mxu0
        %850 = vmatprep.mubr.f32.mxu0 0.0
        %851 = vmatmul.mubr.f32.gmra.mrb[0].mxu0 %v401
        %v852 = vpop.f32.mrb[0].mxu0
        %v853 = vadd.f32 %v380, %v852
        %v854 = vpop.f32.mrb[0].mxu0
        %855 = vmatprep.mubr.f32.mxu0 0.0
        %856 = vmatmul.mubr.f32.gmra.mrb[0].mxu0 %v404
        %v857 = vpop.f32.mrb[0].mxu0
        %v858 = vadd.f32 %v385, %v857
        %v859 = vpop.f32.mrb[0].mxu0
        %860 = vmatprep.mubr.f32.mxu0 0.0
        %861 = vmatmul.mubr.f32.gmra.mrb[0].mxu0 %v407
        %v862 = vpop.f32.mrb[0].mxu0
        %v863 = vadd.f32 %v390, %v862
        %v864 = vpop.f32.mrb[0].mxu0
        %865 = vdwg.mxu0
        %v866 = vtanh.pop %v848
        %v867 = vtanh.pop %v853
        %v868 = vtanh.pop %v858
        %v869 = vtanh.pop %v863
        %v871 = vsel %vm409, %v869, 0
        %873 = vmatprep.subr.mxu0 0.0
        %874 = vmatpush1.msra.mxu0 %v866
        %875 = vmatprep.subr.mxu0 0.0
        %876 = vmatpush1.msra.mxu0 %v867
        %877 = vmatprep.subr.mxu0 0.0
        %878 = vmatpush1.msra.mxu0 %v868
        %879 = vmatprep.subr.mxu0 0.0
        %880 = vmatpush1.msra.mxu0 %v871
        %881 = vmatprep.subr.mxu0 0.0
        %882 = vmatpush1.msra.mxu0 0.0
        %883 = vmatprep.subr.mxu0 0.0
        %884 = vmatpush1.msra.mxu0 0.0
        %885 = vmatprep.subr.mxu0 0.0
        %886 = vmatpush1.msra.mxu0 0.0
        %887 = vmatprep.subr.mxu0 0.0
        %888 = vmatpush1.msra.mxu0 0.0
        %889 = vmatprep.subr.mxu0 0.0
        %890 = vmatpush1.msra.mxu0 0.0
        %891 = vmatprep.subr.mxu0 0.0
        %892 = vmatpush1.msra.mxu0 0.0
        %893 = vmatprep.subr.mxu0 0.0
        %894 = vmatpush1.msra.mxu0 0.0
        %895 = vmatprep.subr.mxu0 0.0
        %896 = vmatpush1.msra.mxu0 0.0
        %897 = vmatprep.subr.mxu0 0.0
        %898 = vmatpush1.msra.mxu0 0.0
        %899 = vmatprep.subr.mxu0 0.0
        %900 = vmatpush1.msra.mxu0 0.0
        %901 = vmatprep.subr.mxu0 0.0
        %902 = vmatpush1.msra.mxu0 0.0
        %903 = vmatprep.subr.mxu0 0.0
        %904 = vmatpush1.msra.mxu0 0.0
        %905 = vmatprep.subr.mxu0 0.0
        %906 = vmatpush1.msra.mxu0 0.0
        %907 = vmatprep.subr.mxu0 0.0
        %908 = vmatpush1.msra.mxu0 0.0
        %909 = vmatprep.subr.mxu0 0.0
        %910 = vmatpush1.msra.mxu0 0.0
        %911 = vmatprep.subr.mxu0 0.0
        %912 = vmatpush1.msra.mxu0 0.0
        %913 = vmatprep.subr.mxu0 0.0
        %914 = vmatpush1.msra.mxu0 0.0
        %915 = vmatprep.subr.mxu0 0.0
        %916 = vmatpush1.msra.mxu0 0.0
        %917 = vmatprep.subr.mxu0 0.0
        %918 = vmatpush1.msra.mxu0 0.0
        %919 = vmatprep.subr.mxu0 0.0
        %920 = vmatpush1.msra.mxu0 0.0
        %921 = vmatprep.subr.mxu0 0.0
        %922 = vmatpush1.msra.mxu0 0.0
        %923 = vmatprep.subr.mxu0 0.0
        %924 = vmatpush1.msra.mxu0 0.0
        %925 = vmatprep.subr.mxu0 0.0
        %926 = vmatpush1.msra.mxu0 0.0
        %927 = vmatprep.subr.mxu0 0.0
        %928 = vmatpush1.msra.mxu0 0.0
        %929 = vmatprep.subr.mxu0 0.0
        %930 = vmatpush1.msra.mxu0 0.0
        %931 = vmatprep.subr.mxu0 0.0
        %932 = vmatpush1.msra.mxu0 0.0
        %933 = vmatprep.subr.mxu0 0.0
        %934 = vmatpush1.msra.mxu0 0.0
        %935 = vmatprep.subr.mxu0 0.0
        %936 = vmatpush1.msra.mxu0 0.0
        %937 = vmatprep.mubr.f32.mxu0 0.0
        %938 = vmatmul.mubr.f32.gmra.mrb[0].mxu0 %v398
        %v939 = vpop.f32.mrb[0].mxu0
        %v940 = vadd.f32 %v375, %v939
        %v941 = vpop.f32.mrb[0].mxu0
        %942 = vmatprep.mubr.f32.mxu0 0.0
        %943 = vmatmul.mubr.f32.gmra.mrb[0].mxu0 %v401
        %v944 = vpop.f32.mrb[0].mxu0
        %v945 = vadd.f32 %v380, %v944
        %v946 = vpop.f32.mrb[0].mxu0
        %947 = vmatprep.mubr.f32.mxu0 0.0
        %948 = vmatmul.mubr.f32.gmra.mrb[0].mxu0 %v404
        %v949 = vpop.f32.mrb[0].mxu0
        %v950 = vadd.f32 %v385, %v949
        %v951 = vpop.f32.mrb[0].mxu0
        %952 = vmatprep.mubr.f32.mxu0 0.0
        %953 = vmatmul.mubr.f32.gmra.mrb[0].mxu0 %v407
        %v954 = vpop.f32.mrb[0].mxu0
        %v955 = vadd.f32 %v390, %v954
        %v956 = vpop.f32.mrb[0].mxu0
        %957 = vdwg.mxu0
        %v958 = vld [vmem:[%s5] sm:$0x1]
        %v959 = vtanh.pop %v940
        %v960 = vtanh.pop %v945
        %v961 = vtanh.pop %v950
        %v962 = vtanh.pop %v955
        %v963 = vld [vmem:[#allocation2] sm:$0x1]
        %965 = vset.pattern.permute.xlu0 0
        %966 = vperm.xlu0 %965, %v963
        %v967 = vpop.permute.xlu0 %966
        %v969 = vlaneseq
        %v970 = vshrl.u32 %v969, 7
        %v971 = vsub.s32 0, %v970
        %v972 = vrot.slane %v967, %v971
        %v974 = vsel %vm396, %v958, 0
        %v977 = vsel %vm409, %v962, 0
        %979 = vmatprep.subr.mxu0 0.0
        %980 = vmatpush1.msra.mxu0 %v959
        %981 = vmatprep.subr.mxu0 0.0
        %982 = vmatpush1.msra.mxu0 %v960
        %983 = vmatprep.subr.mxu0 0.0
        %984 = vmatpush1.msra.mxu0 %v961
        %985 = vmatprep.subr.mxu0 0.0
        %986 = vmatpush1.msra.mxu0 %v977
        %987 = vmatprep.subr.mxu0 0.0
        %988 = vmatpush1.msra.mxu0 0.0
        %989 = vmatprep.subr.mxu0 0.0
        %990 = vmatpush1.msra.mxu0 0.0
        %991 = vmatprep.subr.mxu0 0.0
        %992 = vmatpush1.msra.mxu0 0.0
        %993 = vmatprep.subr.mxu0 0.0
        %994 = vmatpush1.msra.mxu0 0.0
        %995 = vmatprep.subr.mxu0 0.0
        %996 = vmatpush1.msra.mxu0 0.0
        %997 = vmatprep.subr.mxu0 0.0
        %998 = vmatpush1.msra.mxu0 0.0
        %999 = vmatprep.subr.mxu0 0.0
        %1000 = vmatpush1.msra.mxu0 0.0
        %1001 = vmatprep.subr.mxu0 0.0
        %1002 = vmatpush1.msra.mxu0 0.0
        %1003 = vmatprep.subr.mxu0 0.0
        %1004 = vmatpush1.msra.mxu0 0.0
        %1005 = vmatprep.subr.mxu0 0.0
        %1006 = vmatpush1.msra.mxu0 0.0
        %1007 = vmatprep.subr.mxu0 0.0
        %1008 = vmatpush1.msra.mxu0 0.0
        %1009 = vmatprep.subr.mxu0 0.0
        %1010 = vmatpush1.msra.mxu0 0.0
        %1011 = vmatprep.subr.mxu0 0.0
        %1012 = vmatpush1.msra.mxu0 0.0
        %1013 = vmatprep.subr.mxu0 0.0
        %1014 = vmatpush1.msra.mxu0 0.0
        %1015 = vmatprep.subr.mxu0 0.0
        %1016 = vmatpush1.msra.mxu0 0.0
        %1017 = vmatprep.subr.mxu0 0.0
        %1018 = vmatpush1.msra.mxu0 0.0
        %1019 = vmatprep.subr.mxu0 0.0
        %1020 = vmatpush1.msra.mxu0 0.0
        %1021 = vmatprep.subr.mxu0 0.0
        %1022 = vmatpush1.msra.mxu0 0.0
        %1023 = vmatprep.subr.mxu0 0.0
        %1024 = vmatpush1.msra.mxu0 0.0
        %1025 = vmatprep.subr.mxu0 0.0
        %1026 = vmatpush1.msra.mxu0 0.0
        %1027 = vmatprep.subr.mxu0 0.0
        %1028 = vmatpush1.msra.mxu0 0.0
        %1029 = vmatprep.subr.mxu0 0.0
        %1030 = vmatpush1.msra.mxu0 0.0
        %1031 = vmatprep.subr.mxu0 0.0
        %1032 = vmatpush1.msra.mxu0 0.0
        %1033 = vmatprep.subr.mxu0 0.0
        %1034 = vmatpush1.msra.mxu0 0.0
        %1035 = vmatprep.subr.mxu0 0.0
        %1036 = vmatpush1.msra.mxu0 0.0
        %1037 = vmatprep.subr.mxu0 0.0
        %1038 = vmatpush1.msra.mxu0 0.0
        %1039 = vmatprep.subr.mxu0 0.0
        %1040 = vmatpush1.msra.mxu0 0.0
        %1041 = vmatprep.subr.mxu0 0.0
        %1042 = vmatpush1.msra.mxu0 0.0
        %1043 = vmatprep.mubr.f32.mxu0 0.0
        %1044 = vmatmul.mubr.f32.gmra.mrb[0].mxu0 %v974
        %v1045 = vpop.f32.mrb[0].mxu0
        %v1046 = vadd.f32 %v972, %v1045
        %v1047 = vpop.f32.mrb[0].mxu0
        %1048 = vdwg.mxu0
        %1049 = vst [vmem:[%s270] sm:$0x1] %v1046
        %s1050 = sand.u32 %s183, 1
        %s1051 = scalar_lea.sflag [#allocation4], %s1050
        %s1052 = sand.u32 %s183, 1
        %s1053 = scalar_lea.vmem [#allocation3], %s1052
        // Predicated region
        $region49: #{tpu_custom_call.1} parent=47 // pred_check
          %p1054 = pneg %p193
        $region50: #{tpu_custom_call.1} parent=47 // pred_check_branch
          %1056 = sbr.rel (%p1054) target = $region52
        $region51: #{tpu_custom_call.1} parent=47 // pred_region
          %s1058 = ssub.s32 16, 16
          %1059 = vsyncadd %s1051, %s1058
          %s1060 = smul.addr %s23, 16
          %s1061 = scalar_lea.hbm %s7, %s1060
          %s1063 = sshll.u32 %s1053, 4
          %s1064 = int_to_ptr.vmem [resolvable:$true] %s1063
          %1066 = dma.vmem_to_hbm [thread:$0]  %s1064, 16, %s1061, %s1051
        $region52: #{tpu_custom_call.1} parent=47 // pred_fallthru
          _
      $region48: #{tpu_custom_call.1} parent=5 // pred_fallthru
        _
      %p1067 = scmp.le.s32.totalorder 2, %s18
      // Predicated region
      $region53: #{tpu_custom_call.1} parent=5 // pred_check
        %p1068 = pneg %p1067
      $region54: #{tpu_custom_call.1} parent=5 // pred_check_branch
        %1070 = sbr.rel (%p1068) target = $region56
      $region55: #{tpu_custom_call.1} parent=5 // pred_region
        %s1071 = ssub.s32 %s18, 2
        // Predicated region
        $region57: #{tpu_custom_call.1} parent=55 // pred_check
          %p1072 = pneg %p199
        $region58: #{tpu_custom_call.1} parent=55 // pred_check_branch
          %1074 = sbr.rel (%p1072) target = $region60
        $region59: #{tpu_custom_call.1} parent=55 // pred_region
          %s1075 = sand.u32 %s184, 1
          %s1076 = scalar_lea.sflag [#allocation4], %s1075
          %s1077 = sand.u32 %s184, 1
          %s1078 = scalar_lea.vmem [#allocation3], %s1077
          %1079 = dma.done %s1076, 16
        $region60: #{tpu_custom_call.1} parent=55 // pred_fallthru
          _
      $region56: #{tpu_custom_call.1} parent=5 // pred_fallthru
        _
    $region6: #{tpu_custom_call.1} parent=1 // loop_footer
      %s22 = sadd.s32 1, %s18
    $region7: #{tpu_custom_call.1} parent=1 // loop_footer_branch
      %17 = sbr.rel target = $region3
    $region8: #{tpu_custom_call.1} parent=1 // loop_exit
      _
    %1080 = vsyncpa [#allocation4], 1
    %s1081 = scalar_lea.sflag [#allocation4], 1
    %1082 = vsyncpa %s1081, 1

</llo_original>
